<compile_context>
chip_gen: v7x
topology: tpu7x:2x2x1
jax: 0.10.0
libtpu: 0.0.40
codegen_flags: <defaults>
</compile_context>

<pallas_src>
import functools

import jax
import jax.numpy as jnp
from jax import lax
from jax.experimental import pallas as pl
from jax.experimental.pallas import tpu as pltpu


# ----------------------------------------------------------------------------
# Pallas kernel 1: coded-exposure temporal blur (pure VPU weighted sum over frames)
# ----------------------------------------------------------------------------
def _ce_blur_kernel(code_ref, frames_ref, o_ref, *, inv_n):
    # code_ref  : (N, 1, 1)  f32, resident
    # frames_ref: (1, N, RT, 128)  f32 tile
    # o_ref     : (1, RT, 128)     f32 tile (dense sublane x lane stores)
    f = frames_ref[0]                       # (N, RT, L)
    w = code_ref[...] * inv_n               # (N, 1, 1)
    o_ref[0] = jnp.sum(w * f, axis=0)


def _ce_blur_noise_kernel(code_ref, frames_ref, noise_ref, o_ref, on_ref, *, inv_n, sigma):
    f = frames_ref[0]
    w = code_ref[...] * inv_n
    acc = jnp.sum(w * f, axis=0)
    o_ref[0] = acc
    on_ref[0] = acc + sigma * noise_ref[0]  # noise fused in-kernel (no extra XLA pass)


def _pick_reduction_rows(R, n_frames, lane, block_bytes=4 << 20):
    """Largest divisor of R (multiple of 8, or R itself) s.t. the frames block ~<= 4 MiB."""
    cap = max(8, block_bytes // max(1, n_frames * lane * 4))
    for rt in range(min(cap, R), 0, -1):
        if R % rt == 0 and (rt % 8 == 0 or rt == R):
            return rt
    return R


def coded_exposure_blur(frames, ce_code_up, *, ce_code_n, sigma_range=0.0, noise=None):
    """frames: [B, N, C, H, W] f32 -> (ce_blur, ce_blur_noisy) both [B, C, H, W] f32."""
    B, N, C, H, W = frames.shape
    P = C * H * W
    if P % 128 == 0:                       # lane-dense 2-D view of the pixel axis (free reshape)
        R, L = P // 128, 128
    else:                                  # fallback: W on lanes (W is the full dim => legal block)
        R, L = C * H, W
    RT = _pick_reduction_rows(R, N, L)

    fr = frames.reshape(B, N, R, L)
    code = ce_code_up.reshape(N, 1, 1).astype(jnp.float32)
    grid = (B, R // RT)

    vmem_limit = int(min(max(6 * N * RT * L * 4, 32 << 20), 64 << 20))
    cparams = pltpu.CompilerParams(
        dimension_semantics=("parallel", "parallel"),
        vmem_limit_bytes=vmem_limit)

    code_spec = pl.BlockSpec((N, 1, 1), lambda b, p: (0, 0, 0))       # resident
    frames_spec = pl.BlockSpec((1, N, RT, L), lambda b, p: (b, 0, p, 0))
    tile_spec = pl.BlockSpec((1, RT, L), lambda b, p: (b, p, 0))

    if sigma_range != 0.0 and noise is not None:
        noise_v = noise.reshape(B, R, L).astype(jnp.float32)
        kernel = functools.partial(_ce_blur_noise_kernel,
                                   inv_n=1.0 / float(ce_code_n), sigma=float(sigma_range))
        blur, noisy = pl.pallas_call(
            kernel,
            out_shape=(jax.ShapeDtypeStruct((B, R, L), jnp.float32),
                       jax.ShapeDtypeStruct((B, R, L), jnp.float32)),
            grid=grid,
            in_specs=[code_spec, frames_spec, tile_spec],
            out_specs=(tile_spec, tile_spec),
            compiler_params=cparams,
        )(code, fr, noise_v)
        return blur.reshape(B, C, H, W), noisy.reshape(B, C, H, W)

    kernel = functools.partial(_ce_blur_kernel, inv_n=1.0 / float(ce_code_n))
    blur = pl.pallas_call(
        kernel,
        out_shape=jax.ShapeDtypeStruct((B, R, L), jnp.float32),
        grid=grid,
        in_specs=[code_spec, frames_spec],
        out_specs=tile_spec,
        compiler_params=cparams,
    )(code, fr).reshape(B, C, H, W)
    return blur, blur


# ----------------------------------------------------------------------------
# Pallas kernel 2: fused 3-layer 3x3 conv decoder, channels-major, K-folded im2col,
#                  resident weights, direct lane-dense NCHW output.
# ----------------------------------------------------------------------------
def _decoder_kernel(blur_ref, w1_ref, b1_ref, w2_ref, b2_ref, w3_ref, b3_ref,
                    o_ref, xbuf, *, TH, H, W, nt, Cin, C1, C2, C3):
    # blur_ref : (1, Cin, H, W) f32   — resident per batch element (index_map constant in t)
    # w*_ref   : (Cout, 9*Cin)  bf16  — resident folded weights
    # b*_ref   : (Cout, 1)      f32   — resident biases
    # o_ref    : (1, C3, TH*W)  f32   — lane-dense NCHW output tile
    # xbuf     : (Cin, TH+6, W+2) bf16 scratch — row/column zero-padded input slab
    t = pl.program_id(1)
    row0 = t * TH

    # ---- stage the zero-padded input tile (handles 3-row halo + 1-col same padding) ----
    xbuf[...] = jnp.zeros((Cin, TH + 6, W + 2), jnp.bfloat16)
    if nt == 1:
        xbuf[:, 3:3 + TH, 1:1 + W] = blur_ref[0].astype(jnp.bfloat16)
    else:
        @pl.when(t == 0)
        def _():
            xbuf[:, 3:TH + 6, 1:1 + W] = blur_ref[0, :, 0:TH + 3, :].astype(jnp.bfloat16)

        @pl.when(t == nt - 1)
        def _():
            xbuf[:, 0:TH + 3, 1:1 + W] = blur_ref[0, :, H - TH - 3:H, :].astype(jnp.bfloat16)

        if nt > 2:
            @pl.when(jnp.logical_and(t > 0, t < nt - 1))
            def _():
                xbuf[:, :, 1:1 + W] = blur_ref[
                    0, :, pl.ds(row0 - 3, TH + 6), :].astype(jnp.bfloat16)

    def im2col(xp, rows, ci):
        # xp: (ci, rows+2, W+2) bf16 -> concatenated patch (9*ci, rows*W) bf16
        cols = []
        for dh in range(3):
            for dw in range(3):
                cols.append(xp[:, dh:dh + rows, dw:dw + W].reshape(ci, rows * W))
        return jnp.concatenate(cols, axis=0)

    x = xbuf[...]                                           # (Cin, TH+6, W+2) bf16

    # ---- conv1 + bias + relu (one dot, K = 9*Cin), mask rows to per-layer same padding ----
    R1 = TH + 4
    p0 = im2col(x, R1, Cin)                                 # (9*Cin, R1*W)
    h1 = jnp.dot(w1_ref[...], p0, preferred_element_type=jnp.float32) + b1_ref[...]
    h1 = jnp.maximum(h1, 0.0).reshape(C1, R1, W)
    g1 = row0 - 2 + lax.broadcasted_iota(jnp.int32, (1, R1, 1), 1)
    h1 = jnp.where(jnp.logical_and(g1 >= 0, g1 < H), h1, 0.0).astype(jnp.bfloat16)
    zc1 = jnp.zeros((C1, R1, 1), jnp.bfloat16)
    h1p = jnp.concatenate([zc1, h1, zc1], axis=2)           # (C1, R1, W+2)

    # ---- conv2 + bias + relu (one dot, K = 9*C1), mask rows ----
    R2 = TH + 2
    p1 = im2col(h1p, R2, C1)                                # (9*C1, R2*W)
    h2 = jnp.dot(w2_ref[...], p1, preferred_element_type=jnp.float32) + b2_ref[...]
    h2 = jnp.maximum(h2, 0.0).reshape(C2, R2, W)
    g2 = row0 - 1 + lax.broadcasted_iota(jnp.int32, (1, R2, 1), 1)
    h2 = jnp.where(jnp.logical_and(g2 >= 0, g2 < H), h2, 0.0).astype(jnp.bfloat16)
    zc2 = jnp.zeros((C2, R2, 1), jnp.bfloat16)
    h2p = jnp.concatenate([zc2, h2, zc2], axis=2)           # (C2, R2, W+2)

    # ---- conv3 + bias (no relu): direct lane-dense NCHW store, no channel padding ----
    p2 = im2col(h2p, TH, C2)                                # (9*C2, TH*W)
    out = jnp.dot(w3_ref[...], p2, preferred_element_type=jnp.float32) + b3_ref[...]
    o_ref[0] = out                                          # (C3, TH*W)


def _pick_row_tile(H, W, tile_rows):
    for th in range(min(tile_rows, H), 0, -1):
        if H % th == 0 and ((th * W) % 128 == 0 or th == H):
            return th
    return H  # single full-height tile (block == full extent is always legal)


def _fold_weight(w):
    # [3,3,Ci,Co] -> (Co, 9*Ci) bf16, row index = (dh*3+dw)*Ci + ci (matches im2col order)
    kh, kw, ci, co = w.shape
    return jnp.transpose(w.reshape(kh * kw * ci, co)).astype(jnp.bfloat16)


def fused_conv_decoder_nchw(x_nchw, w1, b1, w2, b2, w3, b3, *, tile_rows=32):
    """x_nchw: [B,Cin,H,W] f32; w*: [3,3,Ci,Co]; b*: [Co] -> [B, Co3, H, W] f32."""
    B, Cin, H, W = x_nchw.shape
    C1, C2, C3 = w1.shape[-1], w2.shape[-1], w3.shape[-1]
    TH = _pick_row_tile(H, W, tile_rows)
    nt = H // TH

    w1t, w2t, w3t = _fold_weight(w1), _fold_weight(w2), _fold_weight(w3)
    b1r = b1.reshape(C1, 1).astype(jnp.float32)
    b2r = b2.reshape(C2, 1).astype(jnp.float32)
    b3r = b3.reshape(C3, 1).astype(jnp.float32)

    kernel = functools.partial(_decoder_kernel, TH=TH, H=H, W=W, nt=nt,
                               Cin=Cin, C1=C1, C2=C2, C3=C3)

    # Rough VMEM budget: resident blur (double-buffered) + weights + output blocks + activations.
    est = (2 * Cin * H * W * 4 + 2 * C3 * TH * W * 4
           + (9 * Cin * C1 + 9 * C1 * C2 + 9 * C2 * C3) * 2
           + (Cin + 11 * C1 + 11 * C2 + C3) * (TH + 6) * (W + 2) * 4)
    vmem_limit = int(min(max(2 * est, 32 << 20), 64 << 20))

    out = pl.pallas_call(
        kernel,
        out_shape=jax.ShapeDtypeStruct((B, C3, H * W), jnp.float32),
        grid=(B, nt),
        in_specs=[
            pl.BlockSpec((1, Cin, H, W), lambda b, t: (b, 0, 0, 0)),  # per-batch resident blur
            pl.BlockSpec((C1, 9 * Cin), lambda b, t: (0, 0)),          # resident weights/biases
            pl.BlockSpec((C1, 1), lambda b, t: (0, 0)),
            pl.BlockSpec((C2, 9 * C1), lambda b, t: (0, 0)),
            pl.BlockSpec((C2, 1), lambda b, t: (0, 0)),
            pl.BlockSpec((C3, 9 * C2), lambda b, t: (0, 0)),
            pl.BlockSpec((C3, 1), lambda b, t: (0, 0)),
        ],
        out_specs=pl.BlockSpec((1, C3, TH * W), lambda b, t: (b, 0, t)),
        scratch_shapes=[pltpu.VMEM((Cin, TH + 6, W + 2), jnp.bfloat16)],
        compiler_params=pltpu.CompilerParams(
            dimension_semantics=("parallel", "parallel"),
            vmem_limit_bytes=vmem_limit),
    )(x_nchw, w1t, b1r, w2t, b2r, w3t, b3r)
    return out.reshape(B, C3, H, W)       # free reshape (no transpose pass)


# ----------------------------------------------------------------------------
# CEBDNet params / forward
# ----------------------------------------------------------------------------
def init_params(key, *, ce_code_n=8, frame_n=8, in_channels=3, out_channels=3, hidden=32):
    ks = jax.random.split(key, 4)
    # CE code: binary {0,1}; deterministic draw (emulates ce_weight in {-1,1} + binarize).
    ce_bits = jax.random.bernoulli(ks[0], 0.5, (ce_code_n,)).astype(jnp.float32)
    ce_weight = jnp.where(ce_bits > 0.5, 1.0, -1.0)
    ce_code = (jnp.sign(ce_weight) + 1.0) / 2.0

    def conv_init(k, cin, cout):
        fan_in = 9 * cin
        w = jax.random.normal(k, (3, 3, cin, cout), jnp.float32) * jnp.sqrt(2.0 / fan_in)
        b = jnp.zeros((cout,), jnp.float32)
        return w, b

    w1, b1 = conv_init(ks[1], in_channels, hidden)
    w2, b2 = conv_init(ks[2], hidden, hidden)
    w3, b3 = conv_init(ks[3], hidden, frame_n * out_channels)
    return dict(ce_code=ce_code, w1=w1, b1=b1, w2=w2, b2=b2, w3=w3, b3=b3,
                ce_code_n=ce_code_n, frame_n=frame_n,
                in_channels=in_channels, out_channels=out_channels)


def cebd_forward(frames, params, noise=None, *, sigma_range=0.0, tile_rows=32):
    """frames: [B, frame_n, C, H, W] f32 (PyTorch layout).  Returns
    (output, ce_blur_img, ce_blur_img_noisy, time_idx, ce_code_up)."""
    B, N, C, H, W = frames.shape
    ce_code_n = params["ce_code_n"]
    frame_n = params["frame_n"]
    out_c = params["out_channels"]

    # --- CEBlurNet ---
    up_factor = frame_n // ce_code_n
    ce_code_up = jnp.repeat(params["ce_code"], up_factor)                     # (frame_n,)
    time_idx = (jnp.arange(frame_n, dtype=jnp.float32) / frame_n)[None, :]    # (1, frame_n)
    ce_blur_img, ce_blur_img_noisy = coded_exposure_blur(
        frames, ce_code_up, ce_code_n=ce_code_n, sigma_range=sigma_range, noise=noise)

    # --- DeBlurNet (fused 3-layer conv decoder, NCHW in / NCHW out) ---
    # TODO(synk): time_idx / ce_code conditioning of the real BDNeRV_RC is not modeled.
    dec = fused_conv_decoder_nchw(ce_blur_img_noisy, params["w1"], params["b1"],
                                  params["w2"], params["b2"], params["w3"], params["b3"],
                                  tile_rows=tile_rows)
    output = dec.reshape(B, frame_n, out_c, H, W)                              # free reshape

    return output, ce_blur_img, ce_blur_img_noisy, time_idx, ce_code_up


# ----------------------------------------------------------------------------
# Pure-JAX reference (same math / same bf16-product, f32-accumulate strategy)
# ----------------------------------------------------------------------------
def _reference_forward(frames, params, sigma_range=0.0, noise=None):
    B, N, C, H, W = frames.shape
    ce_code_n = params["ce_code_n"]
    frame_n = params["frame_n"]
    cout = params["out_channels"]
    code_up = jnp.repeat(params["ce_code"], frame_n // ce_code_n)
    blur = (code_up[None, :, None, None, None] * frames).sum(axis=1) / ce_code_n
    noisy = blur if (sigma_range == 0.0 or noise is None) else blur + sigma_range * noise
    x = jnp.transpose(noisy, (0, 2, 3, 1))

    def conv_ref(h, w, b, relu):
        hb = h.astype(jnp.bfloat16).astype(jnp.float32)
        wb = w.astype(jnp.bfloat16).astype(jnp.float32)
        Bh, Hh, Wh, _ = h.shape
        Co = w.shape[-1]
        hp = jnp.pad(hb, ((0, 0), (1, 1), (1, 1), (0, 0)))
        acc = jnp.broadcast_to(b.astype(jnp.float32), (Bh, Hh, Wh, Co))
        for dh in range(3):
            for dw in range(3):
                patch = hp[:, dh:dh + Hh, dw:dw + Wh, :]
                acc = acc + (patch[..., :, None] * wb[dh, dw][None, None, None, :, :]).sum(axis=-2)
        return jnp.maximum(acc, 0.0) if relu else acc

    h1 = conv_ref(x, params["w1"], params["b1"], True)
    h2 = conv_ref(h1, params["w2"], params["b2"], True)
    h3 = conv_ref(h2, params["w3"], params["b3"], False)
    out = h3.reshape(B, H, W, frame_n, cout).transpose(0, 3, 4, 1, 2)
    return out, blur, noisy


if __name__ == "__main__":
    key = jax.random.PRNGKey(0)
    k_param, k_frames = jax.random.split(key, 2)

    B, frame_n, C, H, W = 2, 8, 3, 32, 16
    ce_code_n = 8

    params = init_params(k_param, ce_code_n=ce_code_n, frame_n=frame_n,
                         in_channels=C, out_channels=C, hidden=32)
    frames = jax.random.normal(k_frames, (B, frame_n, C, H, W), jnp.float32)

    ref_out, ref_blur, _ = _reference_forward(frames, params, sigma_range=0.0)

    # tile_rows=8 exercises the multi-tile halo path (first/interior/last tiles);
    # tile_rows=32 exercises the single full-height tile path.
    for tr in (8, 32):
        output, ce_blur_img, ce_blur_img_noisy, time_idx, ce_code_up = cebd_forward(
            frames, params, sigma_range=0.0, tile_rows=tr)
        jax.block_until_ready((output, ce_blur_img, ce_blur_img_noisy))

        assert output.shape == (B, frame_n, C, H, W)
        assert ce_blur_img.shape == (B, C, H, W)
        assert ce_blur_img_noisy.shape == (B, C, H, W)
        assert jnp.allclose(ce_blur_img, ref_blur, atol=1e-5, rtol=1e-5)
        assert jnp.allclose(output, ref_out, atol=2e-2, rtol=2e-2)

    print("KERNEL_OK")
</pallas_src>

<mosaic_0001>
module attributes {stable_mosaic.version = 11 : i64} {
  func.func @_ce_blur_kernel(%arg0: i32, %arg1: i32, %arg2: memref<8x1x1xf32, #tpu.memory_space<vmem>>, %arg3: memref<1x8x12x128xf32, #tpu.memory_space<vmem>>, %arg4: memref<1x12x128xf32, #tpu.memory_space<vmem>>) attributes {dimension_semantics = [#tpu.dimension_semantics<parallel>, #tpu.dimension_semantics<parallel>], iteration_bounds = array<i64: 2, 1>, scalar_prefetch = 0 : i64, scratch_operands = 0 : i64, tpu.core_type = #tpu.core_type<tc>, window_params = [{pipeline_mode = #tpu.pipeline_mode<synchronous>, transform_indices = @transform_0, window_bounds = array<i64: 8, 1, 1>}, {transform_indices = @transform_1, window_bounds = array<i64: 1, 8, 12, 128>}, {transform_indices = @transform_2, window_bounds = array<i64: 1, 12, 128>}]} {
    %c0 = arith.constant 0 : index
    %c0_0 = arith.constant 0 : index
    %c0_1 = arith.constant 0 : index
    %c0_2 = arith.constant 0 : index
    %0 = vector.load %arg3[%c0, %c0_0, %c0_1, %c0_2] : memref<1x8x12x128xf32, #tpu.memory_space<vmem>>, vector<1x8x12x128xf32>
    %1 = vector.shape_cast %0 : vector<1x8x12x128xf32> to vector<8x12x128xf32>
    %c0_3 = arith.constant 0 : index
    %c0_4 = arith.constant 0 : index
    %c0_5 = arith.constant 0 : index
    %2 = vector.load %arg2[%c0_3, %c0_4, %c0_5] : memref<8x1x1xf32, #tpu.memory_space<vmem>>, vector<8x1x1xf32>
    %cst = arith.constant 1.250000e-01 : f32
    %3 = vector.broadcast %cst : f32 to vector<8x1x1xf32>
    %4 = arith.mulf %2, %3 : vector<8x1x1xf32>
    %5 = vector.broadcast %4 : vector<8x1x1xf32> to vector<8x12x128xf32>
    %6 = arith.mulf %5, %1 : vector<8x12x128xf32>
    %cst_6 = arith.constant dense<0.000000e+00> : vector<12x128xf32>
    %7 = vector.multi_reduction <add>, %6, %cst_6 [0] : vector<8x12x128xf32> to vector<12x128xf32>
    %c0_7 = arith.constant 0 : index
    %c0_8 = arith.constant 0 : index
    %c0_9 = arith.constant 0 : index
    %8 = vector.load %arg4[%c0_7, %c0_8, %c0_9] : memref<1x12x128xf32, #tpu.memory_space<vmem>>, vector<1x12x128xf32>
    %9 = vector.shape_cast %8 : vector<1x12x128xf32> to vector<12x128xf32>
    %10 = vector.shape_cast %7 : vector<12x128xf32> to vector<1x12x128xf32>
    tpu.vector_store %arg4[%c0_7, %c0_8, %c0_9], %10 {strides = array<i32>} : memref<1x12x128xf32, #tpu.memory_space<vmem>>, vector<1x12x128xf32>,
    return
  }
  func.func @transform_0(%arg0: i32, %arg1: i32) -> (i32, i32, i32) {
    %c0_i32 = arith.constant 0 : i32
    %c0_i32_0 = arith.constant 0 : i32
    %c0_i32_1 = arith.constant 0 : i32
    %c0_i32_2 = arith.constant 0 : i32
    return %c0_i32, %c0_i32_0, %c0_i32_1 : i32, i32, i32
  }
  func.func @transform_1(%arg0: i32, %arg1: i32) -> (i32, i32, i32, i32) {
    %c0_i32 = arith.constant 0 : i32
    %c0_i32_0 = arith.constant 0 : i32
    %c0_i32_1 = arith.constant 0 : i32
    return %arg0, %c0_i32, %arg1, %c0_i32_0 : i32, i32, i32, i32
  }
  func.func @transform_2(%arg0: i32, %arg1: i32) -> (i32, i32, i32) {
    %c0_i32 = arith.constant 0 : i32
    %c0_i32_0 = arith.constant 0 : i32
    return %arg0, %arg1, %c0_i32 : i32, i32, i32
  }
}

</mosaic_0001>

<llo_original>
// kernel: tpu_custom_call.1
$region0: #{tpu_custom_call.1}
  #allocation0 [shape = 'u32[]', space=smem, size = 0x4, offset = 0x4, fixed_abs, tag = 'smem constant byte address 0x4 - core index']
  #allocation1 [shape = 'u32[144,128]{1,0:T(1,128)}', space=vmem, size = 0x12000, scoped, tag = 'internal scratch']
  %s0 = inlined_call_operand.vmem [shape: f32[8,1,1], index: 0, kind: input, shape index: {}]
  %s1 = inlined_call_operand.vmem [shape: f32[2,8,12,128], index: 1, kind: input, shape index: {}]
  %s2 = inlined_call_operand.vmem [shape: f32[2,12,128], index: 2, kind: output, shape index: {}]
  %s3 = sld [smem:[#allocation0]]
  $region41: #{tpu_custom_call.1} parent=0
    _
  %s5 = ssub.s32 1, %s3
  %s6 = scalar_select 0, %s5, %s3
  loop: start=0, step=1, limit=4
  $region2: #{tpu_custom_call.1} parent=0 // loop_pre_header
    _
  $region3: #{tpu_custom_call.1} parent=0 // loop_header
    %s8 = sphi 0, %s12
    %p9 = scmp.ge.s32.totalorder %s8, 4
    %s15 = sphi 0, %s27
    %s16 = sphi 0, %s23
    %s17 = sphi 0, %s15
    %s18 = sphi 0, %s16
    %s19 = sphi 0, %s17
    %s20 = sphi 0, %s18
    %s28 = sphi 0, %s28
    %s30 = sphi 0, %s28
    %s31 = sphi 0, %s30
    %s45 = sphi 0, %s31
    %s53 = sphi 0, %s55
    %s56 = sphi 0, %s53
    %s57 = sphi 0, %s56
    %s73 = sphi 0, %s57
    %s81 = sphi 0, %s83
    %s84 = sphi 0, %s81
    %s85 = sphi 0, %s84
    %s101 = sphi 0, %s85
  $region4: #{tpu_custom_call.1} parent=0 // loop_header_branch
    %11 = sbr.rel (%p9) target = $region8
  $region5: #{tpu_custom_call.1} parent=0 // loop_body
    %s13 = ssub.s32 %s8, 1
    %s14 = ssub.s32 %s8, 2
    %s21 = sadd.s32 1, %s16
    %p22 = scmp.ge.s32.totalorder %s21, 1
    %s23 = scalar_select %p22, 0, %s21
    %s24 = sadd.s32 1, %s15
    %s25 = scalar_select %p22, %s24, %s15
    %p26 = scmp.ge.s32.totalorder %s25, 2
    %s27 = scalar_select %p26, 0, %s25
    %s29 = sadd.s32 %s28, 1
    %p32 = scmp.eq.s32.totalorder %s8, 1
    %p33 = scmp.ne.s32.totalorder %s28, %s30
    %p34 = scmp.eq.s32.totalorder %s8, 0
    %p35 = por %p33, %p34
    %p36 = scmp.ne.s32.totalorder %s28, %s30
    %p37 = scmp.eq.s32.totalorder %s13, 1
    %p38 = por %p36, %p37
    %p39 = scmp.ne.s32.totalorder %s30, %s31
    %p40 = scmp.eq.s32.totalorder %s13, 0
    %p41 = por %p39, %p40
    %p42 = scmp.ne.s32.totalorder %s30, %s31
    %p43 = scmp.eq.s32.totalorder %s14, 1
    %p44 = por %p42, %p43
    %p46 = scmp.ne.s32.totalorder %s31, %s45
    %p47 = scmp.eq.s32.totalorder %s14, 0
    %p48 = por %p46, %p47
    %s49 = ssub.s32 %s15, %s27
    %s50 = ssub.s32 %s16, %s23
    %s51 = sor.u32 %s49, %s50
    %p52 = scmp.eq.s32.totalorder %s51, 0
    %s54 = sadd.s32 %s53, 1
    %s55 = scalar_select %p52, %s53, %s54
    %p58 = pneg %p52
    %p59 = scmp.eq.s32.totalorder %s8, 1
    %p60 = por %p58, %p59
    %p61 = scmp.ne.s32.totalorder %s53, %s56
    %p62 = scmp.eq.s32.totalorder %s8, 0
    %p63 = por %p61, %p62
    %p64 = scmp.ne.s32.totalorder %s53, %s56
    %p65 = scmp.eq.s32.totalorder %s13, 1
    %p66 = por %p64, %p65
    %p67 = scmp.ne.s32.totalorder %s56, %s57
    %p68 = scmp.eq.s32.totalorder %s13, 0
    %p69 = por %p67, %p68
    %p70 = scmp.ne.s32.totalorder %s56, %s57
    %p71 = scmp.eq.s32.totalorder %s14, 1
    %p72 = por %p70, %p71
    %p74 = scmp.ne.s32.totalorder %s57, %s73
    %p75 = scmp.eq.s32.totalorder %s14, 0
    %p76 = por %p74, %p75
    %s77 = ssub.s32 %s15, %s27
    %s78 = ssub.s32 %s16, %s23
    %s79 = sor.u32 %s77, %s78
    %p80 = scmp.eq.s32.totalorder %s79, 0
    %s82 = sadd.s32 %s81, 1
    %s83 = scalar_select %p80, %s81, %s82
    %p86 = pneg %p80
    %p87 = scmp.eq.s32.totalorder %s8, 1
    %p88 = por %p86, %p87
    %p89 = scmp.ne.s32.totalorder %s81, %s84
    %p90 = scmp.eq.s32.totalorder %s8, 0
    %p91 = por %p89, %p90
    %p92 = scmp.ne.s32.totalorder %s81, %s84
    %p93 = scmp.eq.s32.totalorder %s13, 1
    %p94 = por %p92, %p93
    %p95 = scmp.ne.s32.totalorder %s84, %s85
    %p96 = scmp.eq.s32.totalorder %s13, 0
    %p97 = por %p95, %p96
    %p98 = scmp.ne.s32.totalorder %s84, %s85
    %p99 = scmp.eq.s32.totalorder %s14, 1
    %p100 = por %p98, %p99
    %p102 = scmp.ne.s32.totalorder %s85, %s101
    %p103 = scmp.eq.s32.totalorder %s14, 0
    %p104 = por %p102, %p103
    %p105 = scmp.le.s32.totalorder 1, %s8
    %p106 = scmp.lt.s32.totalorder %s8, 3
    %p107 = pnand %p105, %p106
    %p108 = pneg %p107
    // Predicated region
    $region9: #{tpu_custom_call.1} parent=5 // pred_check
      _
    $region10: #{tpu_custom_call.1} parent=5 // pred_check_branch
      %110 = sbr.rel (%p107) target = $region12
    $region11: #{tpu_custom_call.1} parent=5 // pred_region
      %s111 = ssub.s32 %s8, 1
      // Predicated region
      $region13: #{tpu_custom_call.1} parent=11 // pred_check
        %p112 = pneg %p41
      $region14: #{tpu_custom_call.1} parent=11 // pred_check_branch
        %114 = sbr.rel (%p112) target = $region16
      $region15: #{tpu_custom_call.1} parent=11 // pred_region
        _
      $region16: #{tpu_custom_call.1} parent=11 // pred_fallthru
        _
    $region12: #{tpu_custom_call.1} parent=5 // pred_fallthru
      _
    %p115 = scmp.lt.s32.totalorder %s8, 2
    // Predicated region
    $region17: #{tpu_custom_call.1} parent=5 // pred_check
      %p116 = pneg %p115
    $region18: #{tpu_custom_call.1} parent=5 // pred_check_branch
      %118 = sbr.rel (%p116) target = $region20
    $region19: #{tpu_custom_call.1} parent=5 // pred_region
      // Predicated region
      $region21: #{tpu_custom_call.1} parent=19 // pred_check
        %p119 = pneg %p63
      $region22: #{tpu_custom_call.1} parent=19 // pred_check_branch
        %121 = sbr.rel (%p119) target = $region24
      $region23: #{tpu_custom_call.1} parent=19 // pred_region
        %s122 = smul.u32 2, %s16
        %p123 = scmp.lt.s32.totalorder %s15, 1
        %s124 = scalar_select %p123, %s15, 1
        %p125 = scmp.lt.s32.totalorder %s122, 1
        %s126 = scalar_select %p125, %s122, 1
        %s127 = smul.addr %s124, 16
        %s128 = sadd.s32 %s126, %s127
        %s129 = smul.addr %s128, 8
        %s130 = scalar_lea.vmem %s1, %s129
        %s131 = smul.u32 2, %s16
      $region24: #{tpu_custom_call.1} parent=19 // pred_fallthru
        _
    $region20: #{tpu_custom_call.1} parent=5 // pred_fallthru
      _
    %p132 = scmp.le.s32.totalorder 1, %s8
    %p133 = scmp.lt.s32.totalorder %s8, 3
    %p134 = pnand %p132, %p133
    %p135 = pneg %p134
    // Predicated region
    $region25: #{tpu_custom_call.1} parent=5 // pred_check
      _
    $region26: #{tpu_custom_call.1} parent=5 // pred_check_branch
      %137 = sbr.rel (%p134) target = $region28
    $region27: #{tpu_custom_call.1} parent=5 // pred_region
      %s138 = ssub.s32 %s8, 1
      %p139 = pneg %p41
      %p140 = pneg %p38
      %s141 = smul.u32 2, %s18
      %p142 = scmp.lt.s32.totalorder %s17, 1
      %s143 = scalar_select %p142, %s17, 1
      %p144 = scmp.lt.s32.totalorder %s141, 1
      %s145 = scalar_select %p144, %s141, 1
      %s146 = smul.addr %s143, 16
      %s147 = sadd.s32 %s145, %s146
      %s148 = smul.addr %s147, 8
      %s149 = scalar_lea.vmem %s1, %s148
      %p150 = pneg %p69
      %p151 = pneg %p66
      %p152 = pneg %p97
      %p153 = pneg %p94
      %s154 = smul.u32 2, %s18
      %p155 = scmp.lt.s32.totalorder %s17, 1
      %s156 = scalar_select %p155, %s17, 1
      %p157 = scmp.lt.s32.totalorder %s154, 1
      %s158 = scalar_select %p157, %s154, 1
      %s159 = smul.addr %s156, 2
      %s160 = sadd.s32 %s158, %s159
      %s161 = smul.addr %s160, 8
      %s162 = scalar_lea.vmem %s2, %s161
      %s163 = smul.u32 2, %s18
      %p164 = scmp.lt.s32.totalorder %s17, 1
      %s165 = scalar_select %p164, %s17, 1
      %p166 = scmp.lt.s32.totalorder %s163, 1
      %s167 = scalar_select %p166, %s163, 1
      %s168 = smul.addr %s165, 16
      %s169 = sadd.s32 %s167, %s168
      %s170 = smul.addr %s169, 8
      %s171 = scalar_lea.vmem %s1, %s170
      %s172 = smul.u32 2, %s18
      %s173 = smul.u32 2, %s18
      %p174 = scmp.lt.s32.totalorder %s17, 1
      %s175 = scalar_select %p174, %s17, 1
      %p176 = scmp.lt.s32.totalorder %s173, 1
      %s177 = scalar_select %p176, %s173, 1
      %s178 = smul.addr %s175, 2
      %s179 = sadd.s32 %s177, %s178
      %s180 = smul.addr %s179, 8
      %s181 = scalar_lea.vmem %s2, %s180
      %s182 = smul.u32 2, %s18
      %v183 = vld [vmem:[%s171] sm:$0xff]
      %v184 = vld [vmem:[%s171 + $0x8] sm:$0xf]
      %v185 = vld [vmem:[%s171 + $0x10] sm:$0xff]
      %v186 = vld [vmem:[%s171 + $0x18] sm:$0xf]
      %v187 = vld [vmem:[%s171 + $0x20] sm:$0xff]
      %v188 = vld [vmem:[%s171 + $0x28] sm:$0xf]
      %v189 = vld [vmem:[%s171 + $0x30] sm:$0xff]
      %v190 = vld [vmem:[%s171 + $0x38] sm:$0xf]
      %v191 = vld [vmem:[%s171 + $0x40] sm:$0xff]
      %v192 = vld [vmem:[%s171 + $0x48] sm:$0xf]
      %v193 = vld [vmem:[%s171 + $0x50] sm:$0xff]
      %v194 = vld [vmem:[%s171 + $0x58] sm:$0xf]
      %v195 = vld [vmem:[%s171 + $0x60] sm:$0xff]
      %v196 = vld [vmem:[%s171 + $0x68] sm:$0xf]
      %v197 = vld [vmem:[%s171 + $0x70] sm:$0xff]
      %v198 = vld [vmem:[%s171 + $0x78] sm:$0xf]
      %v199 = vld [vmem:[%s0] sm:$0x1]
      %v200 = vld [vmem:[%s0 + $0x1] sm:$0x1]
      %v201 = vld [vmem:[%s0 + $0x2] sm:$0x1]
      %v202 = vld [vmem:[%s0 + $0x3] sm:$0x1]
      %v203 = vld [vmem:[%s0 + $0x4] sm:$0x1]
      %v204 = vld [vmem:[%s0 + $0x5] sm:$0x1]
      %v205 = vld [vmem:[%s0 + $0x6] sm:$0x1]
      %v206 = vld [vmem:[%s0 + $0x7] sm:$0x1]
      %v207 = vmul.f32 %v199, 0.125
      %v208 = vmul.f32 %v200, 0.125
      %v209 = vmul.f32 %v201, 0.125
      %v210 = vmul.f32 %v202, 0.125
      %v211 = vmul.f32 %v203, 0.125
      %v212 = vmul.f32 %v204, 0.125
      %v213 = vmul.f32 %v205, 0.125
      %v214 = vmul.f32 %v206, 0.125
      %v223 = vlaneseq
      %v224 = vshrl.u32 %v223, 7
      %v225 = vsub.s32 0, %v224
      %v226 = vrot.slane %v207, %v225
      %v227 = vlaneseq
      %v228 = vshrl.u32 %v227, 7
      %v229 = vsub.s32 0, %v228
      %v230 = vrot.slane %v208, %v229
      %v231 = vlaneseq
      %v232 = vshrl.u32 %v231, 7
      %v233 = vsub.s32 0, %v232
      %v234 = vrot.slane %v209, %v233
      %v235 = vlaneseq
      %v236 = vshrl.u32 %v235, 7
      %v237 = vsub.s32 0, %v236
      %v238 = vrot.slane %v210, %v237
      %v239 = vlaneseq
      %v240 = vshrl.u32 %v239, 7
      %v241 = vsub.s32 0, %v240
      %v242 = vrot.slane %v211, %v241
      %v243 = vlaneseq
      %v244 = vshrl.u32 %v243, 7
      %v245 = vsub.s32 0, %v244
      %v246 = vrot.slane %v212, %v245
      %v247 = vlaneseq
      %v248 = vshrl.u32 %v247, 7
      %v249 = vsub.s32 0, %v248
      %v250 = vrot.slane %v213, %v249
      %v251 = vlaneseq
      %v252 = vshrl.u32 %v251, 7
      %v253 = vsub.s32 0, %v252
      %v254 = vrot.slane %v214, %v253
      %255 = vset.pattern.permute.xlu0 0
      %256 = vperm.xlu0 %255, %v226
      %v257 = vpop.permute.xlu0 %256
      %259 = vset.pattern.permute.xlu0 0
      %260 = vperm.xlu0 %259, %v230
      %v261 = vpop.permute.xlu0 %260
      %263 = vset.pattern.permute.xlu0 0
      %264 = vperm.xlu0 %263, %v234
      %v265 = vpop.permute.xlu0 %264
      %267 = vset.pattern.permute.xlu0 0
      %268 = vperm.xlu0 %267, %v238
      %v269 = vpop.permute.xlu0 %268
      %271 = vset.pattern.permute.xlu0 0
      %272 = vperm.xlu0 %271, %v242
      %v273 = vpop.permute.xlu0 %272
      %275 = vset.pattern.permute.xlu0 0
      %276 = vperm.xlu0 %275, %v246
      %v277 = vpop.permute.xlu0 %276
      %279 = vset.pattern.permute.xlu0 0
      %280 = vperm.xlu0 %279, %v250
      %v281 = vpop.permute.xlu0 %280
      %283 = vset.pattern.permute.xlu0 0
      %284 = vperm.xlu0 %283, %v254
      %v285 = vpop.permute.xlu0 %284
      %v287 = vmul.f32 %v257, %v183
      %v288 = vmul.f32 %v257, %v184
      %v289 = vmul.f32 %v261, %v185
      %v290 = vmul.f32 %v261, %v186
      %v291 = vmul.f32 %v265, %v187
      %v292 = vmul.f32 %v265, %v188
      %v293 = vmul.f32 %v269, %v189
      %v294 = vmul.f32 %v269, %v190
      %v295 = vmul.f32 %v273, %v191
      %v296 = vmul.f32 %v273, %v192
      %v297 = vmul.f32 %v277, %v193
      %v298 = vmul.f32 %v277, %v194
      %v299 = vmul.f32 %v281, %v195
      %v300 = vmul.f32 %v281, %v196
      %v301 = vmul.f32 %v285, %v197
      %v302 = vmul.f32 %v285, %v198
      %v303 = vadd.f32 %v287, %v289
      %v304 = vadd.f32 %v303, %v291
      %v305 = vadd.f32 %v304, %v293
      %v306 = vadd.f32 %v305, %v295
      %v307 = vadd.f32 %v306, %v297
      %v308 = vadd.f32 %v307, %v299
      %v309 = vadd.f32 %v308, %v301
      %vm310 = vcmask 1043456
      %v311 = vsel %vm310, %v288, 0.0
      %v312 = vsel %vm310, %v290, 0.0
      %v313 = vadd.f32 %v311, %v312
      %v314 = vsel %vm310, %v292, 0.0
      %v315 = vadd.f32 %v313, %v314
      %v316 = vsel %vm310, %v294, 0.0
      %v317 = vadd.f32 %v315, %v316
      %v318 = vsel %vm310, %v296, 0.0
      %v319 = vadd.f32 %v317, %v318
      %v320 = vsel %vm310, %v298, 0.0
      %v321 = vadd.f32 %v319, %v320
      %v322 = vsel %vm310, %v300, 0.0
      %v323 = vadd.f32 %v321, %v322
      %v324 = vsel %vm310, %v302, 0.0
      %v325 = vadd.f32 %v323, %v324
      %326 = vst [vmem:[%s181] sm:$0xff] %v309
      %327 = vst [vmem:[%s181 + $0x8] sm:$0xf] %v325
      %s328 = smul.u32 2, %s18
      %p329 = scmp.lt.s32.totalorder %s17, 1
      %s330 = scalar_select %p329, %s17, 1
      %p331 = scmp.lt.s32.totalorder %s328, 1
      %s332 = scalar_select %p331, %s328, 1
      %s333 = smul.addr %s330, 2
      %s334 = sadd.s32 %s332, %s333
      %s335 = smul.addr %s334, 8
      %s336 = scalar_lea.vmem %s2, %s335
      // Predicated region
      $region29: #{tpu_custom_call.1} parent=27 // pred_check
        %p337 = pneg %p94
      $region30: #{tpu_custom_call.1} parent=27 // pred_check_branch
        %339 = sbr.rel (%p337) target = $region32
      $region31: #{tpu_custom_call.1} parent=27 // pred_region
        %s340 = smul.u32 2, %s18
      $region32: #{tpu_custom_call.1} parent=27 // pred_fallthru
        _
    $region28: #{tpu_custom_call.1} parent=5 // pred_fallthru
      _
    %p341 = scmp.le.s32.totalorder 2, %s8
    // Predicated region
    $region33: #{tpu_custom_call.1} parent=5 // pred_check
      %p342 = pneg %p341
    $region34: #{tpu_custom_call.1} parent=5 // pred_check_branch
      %344 = sbr.rel (%p342) target = $region36
    $region35: #{tpu_custom_call.1} parent=5 // pred_region
      %s345 = ssub.s32 %s8, 2
      // Predicated region
      $region37: #{tpu_custom_call.1} parent=35 // pred_check
        %p346 = pneg %p100
      $region38: #{tpu_custom_call.1} parent=35 // pred_check_branch
        %348 = sbr.rel (%p346) target = $region40
      $region39: #{tpu_custom_call.1} parent=35 // pred_region
        %s349 = smul.u32 2, %s20
        %p350 = scmp.lt.s32.totalorder %s19, 1
        %s351 = scalar_select %p350, %s19, 1
        %p352 = scmp.lt.s32.totalorder %s349, 1
        %s353 = scalar_select %p352, %s349, 1
        %s354 = smul.addr %s351, 2
        %s355 = sadd.s32 %s353, %s354
        %s356 = smul.addr %s355, 8
        %s357 = scalar_lea.vmem %s2, %s356
      $region40: #{tpu_custom_call.1} parent=35 // pred_fallthru
        _
    $region36: #{tpu_custom_call.1} parent=5 // pred_fallthru
      _
  $region6: #{tpu_custom_call.1} parent=0 // loop_footer
    %s12 = sadd.s32 1, %s8
  $region7: #{tpu_custom_call.1} parent=0 // loop_footer_branch
    %7 = sbr.rel target = $region3
  $region8: #{tpu_custom_call.1} parent=0 // loop_exit
    _

</llo_original>
